<compile_context>
chip_gen: v6e
topology: v6e:2x2x1
jax: 0.10.0
libtpu: 0.0.40
codegen_flags: <defaults>
</compile_context>

<pallas_src>
import functools

import jax
import jax.numpy as jnp
from jax.experimental import pallas as pl
from jax.experimental.pallas import tpu as pltpu

LEAKY_SLOPE = 0.01   # nn.LeakyReLU default
BN_EPS = 1e-5        # nn.BatchNorm2d default


def _round_up(x, m):
    return (x + m - 1) // m * m


# ----------------------------------------------------------------------------
# Fused matmul Pallas kernels:  out = act(A @ W + bias [+ residual])
# ----------------------------------------------------------------------------
def _apply_act(y, act):
    if act == "leaky":
        return jnp.where(y > 0, y, LEAKY_SLOPE * y)
    if act == "relu":
        return jnp.maximum(y, 0.0)
    return y


def _mm_kernel(a_ref, w_ref, b_ref, o_ref, *, act):
    acc = jnp.dot(a_ref[...], w_ref[...], preferred_element_type=jnp.float32)
    o_ref[...] = _apply_act(acc + b_ref[...], act)


def _mm_res_kernel(a_ref, w_ref, b_ref, r_ref, o_ref, *, act):
    acc = jnp.dot(a_ref[...], w_ref[...], preferred_element_type=jnp.float32)
    o_ref[...] = _apply_act(acc + b_ref[...] + r_ref[...], act)


def fused_matmul(a, w, bias, *, act="none", residual=None):
    """act((a @ w) + bias [+ residual]).

    a: (M, K) -> cast to bf16, w: (K, N) bf16 (BN pre-folded), bias: (N,) f32,
    residual: optional (M, N) f32.  Returns (M, N) f32.  K is never tiled.
    """
    M, K = a.shape
    K2, N = w.shape
    assert K == K2, (K, K2)

    # --- tile selection ----------------------------------------------------
    Np = _round_up(N, 128)                    # lane-dense output columns
    if Np <= 1024:
        TN = Np
    elif Np % 8192 == 0:
        TN = 8192                             # dec_fc weight stream
    elif Np % 1024 == 0:
        TN = 1024
    else:
        TN = 128
    tm_cap = 4096 if TN <= 1024 else 512      # keep live VMEM ~<20 MiB
    TM = _round_up(M, 16) if M <= tm_cap else tm_cap
    Mp = _round_up(M, TM)

    # --- operand padding (skipped when already aligned) ---------------------
    a = a.astype(jnp.bfloat16)
    if Mp != M:
        a = jnp.pad(a, ((0, Mp - M), (0, 0)))
    if w.dtype != jnp.bfloat16:
        w = w.astype(jnp.bfloat16)
    if Np != N:
        w = jnp.pad(w, ((0, 0), (0, Np - N)))
    b2 = bias.astype(jnp.float32).reshape(1, N)
    if Np != N:
        b2 = jnp.pad(b2, ((0, 0), (0, Np - N)))

    in_specs = [
        pl.BlockSpec((TM, K), lambda i, j: (i, 0)),
        pl.BlockSpec((K, TN), lambda i, j: (0, j)),
        pl.BlockSpec((1, TN), lambda i, j: (0, j)),
    ]
    args = [a, w, b2]
    if residual is not None:
        r = residual.astype(jnp.float32)
        if Mp != M or Np != N:
            r = jnp.pad(r, ((0, Mp - M), (0, Np - N)))
        in_specs.append(pl.BlockSpec((TM, TN), lambda i, j: (i, j)))
        args.append(r)
        kernel = functools.partial(_mm_res_kernel, act=act)
    else:
        kernel = functools.partial(_mm_kernel, act=act)

    out = pl.pallas_call(
        kernel,
        out_shape=jax.ShapeDtypeStruct((Mp, Np), jnp.float32),
        grid=(Mp // TM, Np // TN),
        in_specs=in_specs,
        out_specs=pl.BlockSpec((TM, TN), lambda i, j: (i, j)),
        compiler_params=pltpu.CompilerParams(
            dimension_semantics=("parallel", "parallel"),
            vmem_limit_bytes=32 * 1024 * 1024),
    )(*args)
    if Mp != M or Np != N:
        out = out[:M, :N]
    return out


# ----------------------------------------------------------------------------
# Conv / ConvTranspose / Linear wrappers (im2col glue in plain JAX, bf16)
# ----------------------------------------------------------------------------
def _im2col(x, k, pad):
    """x: (B,H,W,C) f32 -> bf16 patches (B,Ho,Wo,k*k*C), stride 1."""
    B, H, W, C = x.shape
    xb = x.astype(jnp.bfloat16)
    if pad:
        xb = jnp.pad(xb, ((0, 0), (pad, pad), (pad, pad), (0, 0)))
    Ho = H + 2 * pad - k + 1
    Wo = W + 2 * pad - k + 1
    if k == 1:
        return xb, Ho, Wo
    cols = [xb[:, dy:dy + Ho, dx:dx + Wo, :]
            for dy in range(k) for dx in range(k)]
    return jnp.concatenate(cols, axis=-1), Ho, Wo


def conv2d_block(x, wmat, bias, *, k, pad, act, residual=None):
    """Conv2d(k, stride=1, pad) [+BN folded] + act (+ residual add before act)."""
    B, H, W, C = x.shape
    Cout = bias.shape[0]
    patches, Ho, Wo = _im2col(x, k, pad)
    a = patches.reshape(B * Ho * Wo, k * k * C)
    res = None if residual is None else residual.reshape(B * Ho * Wo, Cout)
    out = fused_matmul(a, wmat, bias, act=act, residual=res)
    return out.reshape(B, Ho, Wo, Cout)


def conv_transpose2d_block(x, wmat, bias, *, act):
    """ConvTranspose2d(kernel=4, stride=2, padding=1) [+BN folded] + act.

    Sub-pixel lowering: one matmul computes all 4 output parities from 2x2
    taps of the 1-padded input (K = 4*Cin, N = 4*Cout); the parity outputs are
    then interleaved into the (2H, 2W) map.  No zero-dilated buffer, no 16x
    patch blow-up, no multiply-by-zero MACs.
    """
    B, H, W, C = x.shape
    Cout = bias.shape[0] // 4
    xb = jnp.pad(x.astype(jnp.bfloat16), ((0, 0), (1, 1), (1, 1), (0, 0)))
    cols = [xb[:, di:di + H + 1, dj:dj + W + 1, :]
            for di in range(2) for dj in range(2)]
    a = jnp.concatenate(cols, axis=-1).reshape(B * (H + 1) * (W + 1), 4 * C)
    y = fused_matmul(a, wmat, bias, act=act)
    y = y.reshape(B, H + 1, W + 1, 4, Cout)
    ee = y[:, :H, :W, 0, :]     # out[2m,   2n  ]
    eo = y[:, :H, 1:, 1, :]     # out[2m,   2n+1]
    oe = y[:, 1:, :W, 2, :]     # out[2m+1, 2n  ]
    oo = y[:, 1:, 1:, 3, :]     # out[2m+1, 2n+1]
    row_e = jnp.stack([ee, eo], axis=3).reshape(B, H, 2 * W, Cout)
    row_o = jnp.stack([oe, oo], axis=3).reshape(B, H, 2 * W, Cout)
    return jnp.stack([row_e, row_o], axis=2).reshape(B, 2 * H, 2 * W, Cout)


def linear_block(x, wmat, bias, *, act):
    """Flatten (done by caller) + Linear + act."""
    return fused_matmul(x, wmat, bias, act=act)


def residual_block(x, rp):
    """conv3x3+BN+LeakyReLU -> conv3x3+BN (+ 1x1-conv+BN skip), add, LeakyReLU."""
    y = conv2d_block(x, *rp["w1"], k=3, pad=1, act="leaky")
    if "ws" in rp:
        skip = conv2d_block(x, *rp["ws"], k=1, pad=0, act="none")
    else:
        skip = x
    return conv2d_block(y, *rp["w2"], k=3, pad=1, act="leaky", residual=skip)


# ----------------------------------------------------------------------------
# Parameter init (deterministic, synthetic, torch layouts)
# ----------------------------------------------------------------------------
def _conv_init(key, cout, cin, k):
    kw, kb = jax.random.split(key)
    w = jax.random.normal(kw, (cout, cin, k, k), jnp.float32) / jnp.sqrt(cin * k * k)
    b = jax.random.normal(kb, (cout,), jnp.float32) * 0.01
    return w, b


def _convT_init(key, cin, cout, k):
    kw, kb = jax.random.split(key)
    w = jax.random.normal(kw, (cin, cout, k, k), jnp.float32) / jnp.sqrt(cin * k * k)
    b = jax.random.normal(kb, (cout,), jnp.float32) * 0.01
    return w, b


def _linear_init(key, fout, fin):
    kw, kb = jax.random.split(key)
    w = jax.random.normal(kw, (fout, fin), jnp.float32) / jnp.sqrt(fin)
    b = jax.random.normal(kb, (fout,), jnp.float32) * 0.01
    return w, b


def init_params(key, in_channels=1, out_channels=3, bottleneck=256, ifm=16):
    keys = iter(jax.random.split(key, 32))
    p = {}

    def res_params(cin, cout):
        d = {}
        d["w1"], d["b1"] = _conv_init(next(keys), cout, cin, 3)
        d["w2"], d["b2"] = _conv_init(next(keys), cout, cout, 3)
        if cin != cout:
            d["ws"], d["bs"] = _conv_init(next(keys), cout, cin, 1)
        return d

    # FaceEncoder
    p["enc_conv0"] = _conv_init(next(keys), ifm, in_channels, 3)
    p["res1"] = res_params(ifm, ifm)
    p["res2"] = res_params(ifm, ifm * 2)
    p["res3"] = res_params(ifm * 2, ifm * 4)
    p["res4"] = res_params(ifm * 4, ifm)
    p["enc_fc"] = _linear_init(next(keys), bottleneck, ifm * 16 * 16)
    # Decoder
    p["dec_fc"] = _linear_init(next(keys), 32 * 64 * 16, bottleneck)
    p["up1"] = _convT_init(next(keys), 16, 64, 4)
    p["up2"] = _convT_init(next(keys), 64, 96, 4)
    p["up3"] = _convT_init(next(keys), 96, 96, 4)
    p["dec_c1"] = _conv_init(next(keys), 64, 96, 3)
    p["dec_c2"] = _conv_init(next(keys), out_channels, 64, 3)
    return p


# ----------------------------------------------------------------------------
# One-time parameter preprocessing: matmul-ready bf16 weights, BN folded
# ----------------------------------------------------------------------------
def _bn_fold(wmat, b, cout):
    """Fold eval-mode BatchNorm (PyTorch default stats) into weight cols/bias."""
    gamma = jnp.ones((cout,), jnp.float32)
    beta = jnp.zeros((cout,), jnp.float32)
    mean = jnp.zeros((cout,), jnp.float32)
    var = jnp.ones((cout,), jnp.float32)
    scale = gamma * jax.lax.rsqrt(var + BN_EPS)
    return wmat * scale[None, :], (b - mean) * scale + beta


def _prep_conv(w, b, *, norm=True):
    """torch (Cout,Cin,k,k) -> (k*k*Cin, Cout) matching im2col (dy,dx,ci) order."""
    cout, cin, k, _ = w.shape
    wmat = jnp.transpose(w, (2, 3, 1, 0)).reshape(k * k * cin, cout)
    if norm:
        wmat, b = _bn_fold(wmat, b, cout)
    return wmat.astype(jnp.bfloat16), b.astype(jnp.float32)


def _prep_convT_subpixel(wt, b):
    """torch ConvTranspose2d(4,2,1) weight (Cin,Cout,4,4) -> (4*Cin, 4*Cout).

    Row block (di,dj) = 2x2 tap of the 1-padded input; column block p = output
    parity (a,b) in order (0,0),(0,1),(1,0),(1,1);
    W[(di,dj)*Cin+ci, p*Cout+co] = wt[ci, co, (3-a)-2*di, (3-b)-2*dj].
    """
    cin, cout, k, _ = wt.shape
    assert k == 4
    rows = []
    for di in range(2):
        for dj in range(2):
            cols = [wt[:, :, (3 - a) - 2 * di, (3 - bb) - 2 * dj]
                    for (a, bb) in ((0, 0), (0, 1), (1, 0), (1, 1))]
            rows.append(jnp.concatenate(cols, axis=1))       # (Cin, 4*Cout)
    wmat = jnp.concatenate(rows, axis=0)                      # (4*Cin, 4*Cout)
    bias4 = jnp.tile(b, 4)
    # BN fold: with the default eval stats this is identical for every parity.
    wmat, bias4 = _bn_fold(wmat, bias4, 4 * cout)
    return wmat.astype(jnp.bfloat16), bias4.astype(jnp.float32)


def _prep_linear(w, b):
    return jnp.transpose(w).astype(jnp.bfloat16), b.astype(jnp.float32)


def preprocess_params(p):
    def prep_res(d):
        out = {"w1": _prep_conv(d["w1"], d["b1"]),
               "w2": _prep_conv(d["w2"], d["b2"])}
        if "ws" in d:
            out["ws"] = _prep_conv(d["ws"], d["bs"])
        return out

    return {
        "enc_conv0": _prep_conv(*p["enc_conv0"]),
        "res1": prep_res(p["res1"]),
        "res2": prep_res(p["res2"]),
        "res3": prep_res(p["res3"]),
        "res4": prep_res(p["res4"]),
        "enc_fc": _prep_linear(*p["enc_fc"]),
        "dec_fc": _prep_linear(*p["dec_fc"]),
        "up1": _prep_convT_subpixel(*p["up1"]),
        "up2": _prep_convT_subpixel(*p["up2"]),
        "up3": _prep_convT_subpixel(*p["up3"]),
        "dec_c1": _prep_conv(*p["dec_c1"]),
        "dec_c2": _prep_conv(*p["dec_c2"], norm=False),
    }


# ----------------------------------------------------------------------------
# Forward pass (Face2EnvNetwork)
# ----------------------------------------------------------------------------
def face2env_forward(pp, x_nchw):
    B = x_nchw.shape[0]
    x = jnp.transpose(x_nchw, (0, 2, 3, 1)).astype(jnp.float32)   # NCHW -> NHWC

    # ---- FaceEncoder ----
    x = conv2d_block(x, *pp["enc_conv0"], k=3, pad=1, act="leaky")
    x = residual_block(x, pp["res1"])
    x = residual_block(x, pp["res2"])
    x = residual_block(x, pp["res3"])
    x = residual_block(x, pp["res4"])
    flat = jnp.transpose(x, (0, 3, 1, 2)).reshape(B, -1)   # flatten in NCHW order
    latent = linear_block(flat, *pp["enc_fc"], act="none")          # (B, 256)

    # ---- Decoder ----
    m = linear_block(latent, *pp["dec_fc"], act="relu")             # (B, 16*32*64)
    y = jnp.transpose(m.reshape(B, 16, 32, 64), (0, 2, 3, 1))       # (B,32,64,16)
    y = conv_transpose2d_block(y, *pp["up1"], act="leaky")          # (B,64,128,64)
    y = conv_transpose2d_block(y, *pp["up2"], act="leaky")          # (B,128,256,96)
    y = conv_transpose2d_block(y, *pp["up3"], act="leaky")          # (B,256,512,96)
    y = conv2d_block(y, *pp["dec_c1"], k=3, pad=1, act="leaky")     # (B,256,512,64)
    y = conv2d_block(y, *pp["dec_c2"], k=3, pad=1, act="relu")      # (B,256,512,3)

    return jnp.transpose(y, (0, 3, 1, 2))                           # NHWC -> NCHW


if __name__ == "__main__":
    key = jax.random.PRNGKey(0)
    kp, kx = jax.random.split(key)
    params = init_params(kp)
    pp = preprocess_params(params)   # one-time weight re-layout / BN fold / bf16
    # B=2, 1-channel 16x16 face crop (16x16 keeps the ifm*16*16 flatten of the
    # reconstructed stride-1 residual encoder consistent).
    x = jax.random.normal(kx, (2, 1, 16, 16), jnp.float32)

    out = face2env_forward(pp, x)
    out = jax.block_until_ready(out)

    assert out.shape == (2, 3, 256, 512), out.shape
    assert out.dtype == jnp.float32
    assert bool(jnp.all(out >= 0.0))       # final ReLU output
    assert bool(jnp.all(jnp.isfinite(out)))
    print("KERNEL_OK")
</pallas_src>

<mosaic_0001>
module attributes {stable_mosaic.version = 11 : i64} {
  func.func @_mm_kernel(%arg0: i32, %arg1: i32, %arg2: memref<512x9xbf16, #tpu.memory_space<vmem>>, %arg3: memref<9x128xbf16, #tpu.memory_space<vmem>>, %arg4: memref<1x128xf32, #tpu.memory_space<vmem>>, %arg5: memref<512x128xf32, #tpu.memory_space<vmem>>) attributes {dimension_semantics = [#tpu.dimension_semantics<parallel>, #tpu.dimension_semantics<parallel>], iteration_bounds = array<i64: 1, 1>, scalar_prefetch = 0 : i64, scratch_operands = 0 : i64, tpu.core_type = #tpu.core_type<tc>, window_params = [{transform_indices = @transform_0, window_bounds = array<i64: 512, 9>}, {transform_indices = @transform_1, window_bounds = array<i64: 9, 128>}, {transform_indices = @transform_2, window_bounds = array<i64: 1, 128>}, {transform_indices = @transform_3, window_bounds = array<i64: 512, 128>}]} {
    %c0 = arith.constant 0 : index
    %c0_0 = arith.constant 0 : index
    %0 = vector.load %arg2[%c0, %c0_0] : memref<512x9xbf16, #tpu.memory_space<vmem>>, vector<512x9xbf16>
    %c0_1 = arith.constant 0 : index
    %c0_2 = arith.constant 0 : index
    %1 = vector.load %arg3[%c0_1, %c0_2] : memref<9x128xbf16, #tpu.memory_space<vmem>>, vector<9x128xbf16>
    %cst = arith.constant dense<0.000000e+00> : vector<512x128xf32>
    %2 = tpu.matmul %0, %1, %cst {dimension_numbers = #tpu.dot_dimension_numbers<[1], [0], [0], [1], [0, 0, 1, 1], [], []>} : vector<512x9xbf16>, vector<9x128xbf16>, vector<512x128xf32> -> vector<512x128xf32>
    %c0_3 = arith.constant 0 : index
    %c0_4 = arith.constant 0 : index
    %3 = vector.load %arg4[%c0_3, %c0_4] : memref<1x128xf32, #tpu.memory_space<vmem>>, vector<1x128xf32>
    %4 = vector.broadcast %3 : vector<1x128xf32> to vector<512x128xf32>
    %5 = arith.addf %2, %4 : vector<512x128xf32>
    %cst_5 = arith.constant 0.000000e+00 : f32
    %6 = vector.broadcast %cst_5 : f32 to vector<512x128xf32>
    %7 = arith.cmpf ogt, %5, %6 : vector<512x128xf32>
    %cst_6 = arith.constant 0.00999999977 : f32
    %8 = vector.broadcast %cst_6 : f32 to vector<512x128xf32>
    %9 = arith.mulf %8, %5 : vector<512x128xf32>
    %10 = arith.select %7, %5, %9 : vector<512x128xi1>, vector<512x128xf32>
    %c0_7 = arith.constant 0 : index
    %c0_8 = arith.constant 0 : index
    %11 = vector.load %arg5[%c0_7, %c0_8] : memref<512x128xf32, #tpu.memory_space<vmem>>, vector<512x128xf32>
    tpu.vector_store %arg5[%c0_7, %c0_8], %10 {strides = array<i32>} : memref<512x128xf32, #tpu.memory_space<vmem>>, vector<512x128xf32>,
    return
  }
  func.func @transform_0(%arg0: i32, %arg1: i32) -> (i32, i32) {
    %c0_i32 = arith.constant 0 : i32
    %c0_i32_0 = arith.constant 0 : i32
    return %arg0, %c0_i32 : i32, i32
  }
  func.func @transform_1(%arg0: i32, %arg1: i32) -> (i32, i32) {
    %c0_i32 = arith.constant 0 : i32
    %c0_i32_0 = arith.constant 0 : i32
    return %c0_i32, %arg1 : i32, i32
  }
  func.func @transform_2(%arg0: i32, %arg1: i32) -> (i32, i32) {
    %c0_i32 = arith.constant 0 : i32
    %c0_i32_0 = arith.constant 0 : i32
    return %c0_i32, %arg1 : i32, i32
  }
  func.func @transform_3(%arg0: i32, %arg1: i32) -> (i32, i32) {
    %c0_i32 = arith.constant 0 : i32
    return %arg0, %arg1 : i32, i32
  }
}

</mosaic_0001>

<llo_original>
// kernel: tpu_custom_call.1
$region0: #{tpu_custom_call.1}
  #allocation0 [shape = 'u32[]', space=smem, size = 0x4, offset = 0x4, fixed_abs, tag = 'smem constant byte address 0x4 - core index']
  #allocation1 [shape = 'u32[144,128]{1,0:T(1,128)}', space=vmem, size = 0x12000, scoped, tag = 'internal scratch']
  %s0 = inlined_call_operand.vmem [shape: bf16[512,9], index: 0, kind: input, shape index: {}]
  %s1 = inlined_call_operand.vmem [shape: bf16[9,128], index: 1, kind: input, shape index: {}]
  %s2 = inlined_call_operand.vmem [shape: f32[1,128], index: 2, kind: input, shape index: {}]
  %s3 = inlined_call_operand.hbm [shape: f32[512,128], index: 3, kind: output, shape index: {}]
  %s4 = sld [smem:[#allocation0]]
  $region22: #{tpu_custom_call.1} parent=0
    _
  %s6 = ssub.s32 1, %s4
  %s7 = scalar_select 0, %s6, %s4
  $region1: #{tpu_custom_call.1} parent=0
    #allocation2 [shape = 'u8[262144]{0}', space=vmem, size = 0x40000, scoped, tag = 'output window, operand 0, single buffered']
    #allocation3 [shape = 's32[1]{0}', space=sflag, size = 0x4, scoped, tag = 'scoped memory for tpu_custom_call.1']
    %8 = vsyncpa [#allocation3], 0
    // Predicated region
    $region2: #{tpu_custom_call.1} parent=1 // pred_check
      _
    $region3: #{tpu_custom_call.1} parent=1 // pred_check_branch
      %10 = sbr.rel (0) target = $region5
    $region4: #{tpu_custom_call.1} parent=1 // pred_region
      _
    $region5: #{tpu_custom_call.1} parent=1 // pred_fallthru
      _
    // Predicated region
    $region6: #{tpu_custom_call.1} parent=1 // pred_check
      _
    $region7: #{tpu_custom_call.1} parent=1 // pred_check_branch
      %12 = sbr.rel (0) target = $region9
    $region8: #{tpu_custom_call.1} parent=1 // pred_region
      _
    $region9: #{tpu_custom_call.1} parent=1 // pred_fallthru
      _
    // Predicated region
    $region10: #{tpu_custom_call.1} parent=1 // pred_check
      _
    $region11: #{tpu_custom_call.1} parent=1 // pred_check_branch
      %14 = sbr.rel (0) target = $region13
    $region12: #{tpu_custom_call.1} parent=1 // pred_region
      _
    $region13: #{tpu_custom_call.1} parent=1 // pred_fallthru
      _
    %v16 = vld [vmem:[%s0] sm:$0xf]
    %v17 = vld [vmem:[%s0 + $0x4] sm:$0xf]
    %v18 = vld [vmem:[%s0 + $0x8] sm:$0xf]
    %v19 = vld [vmem:[%s0 + $0xc] sm:$0xf]
    %v20 = vld [vmem:[%s0 + $0x10] sm:$0xf]
    %v21 = vld [vmem:[%s0 + $0x14] sm:$0xf]
    %v22 = vld [vmem:[%s0 + $0x18] sm:$0xf]
    %v23 = vld [vmem:[%s0 + $0x1c] sm:$0xf]
    %v24 = vld [vmem:[%s0 + $0x20] sm:$0xf]
    %v25 = vld [vmem:[%s0 + $0x24] sm:$0xf]
    %v26 = vld [vmem:[%s0 + $0x28] sm:$0xf]
    %v27 = vld [vmem:[%s0 + $0x2c] sm:$0xf]
    %v28 = vld [vmem:[%s0 + $0x30] sm:$0xf]
    %v29 = vld [vmem:[%s0 + $0x34] sm:$0xf]
    %v30 = vld [vmem:[%s0 + $0x38] sm:$0xf]
    %v31 = vld [vmem:[%s0 + $0x3c] sm:$0xf]
    %v32 = vld [vmem:[%s0 + $0x40] sm:$0xf]
    %v33 = vld [vmem:[%s0 + $0x44] sm:$0xf]
    %v34 = vld [vmem:[%s0 + $0x48] sm:$0xf]
    %v35 = vld [vmem:[%s0 + $0x4c] sm:$0xf]
    %v36 = vld [vmem:[%s0 + $0x50] sm:$0xf]
    %v37 = vld [vmem:[%s0 + $0x54] sm:$0xf]
    %v38 = vld [vmem:[%s0 + $0x58] sm:$0xf]
    %v39 = vld [vmem:[%s0 + $0x5c] sm:$0xf]
    %v40 = vld [vmem:[%s0 + $0x60] sm:$0xf]
    %v41 = vld [vmem:[%s0 + $0x64] sm:$0xf]
    %v42 = vld [vmem:[%s0 + $0x68] sm:$0xf]
    %v43 = vld [vmem:[%s0 + $0x6c] sm:$0xf]
    %v44 = vld [vmem:[%s0 + $0x70] sm:$0xf]
    %v45 = vld [vmem:[%s0 + $0x74] sm:$0xf]
    %v46 = vld [vmem:[%s0 + $0x78] sm:$0xf]
    %v47 = vld [vmem:[%s0 + $0x7c] sm:$0xf]
    %v48 = vld [vmem:[%s0 + $0x80] sm:$0xf]
    %v49 = vld [vmem:[%s0 + $0x84] sm:$0xf]
    %v50 = vld [vmem:[%s0 + $0x88] sm:$0xf]
    %v51 = vld [vmem:[%s0 + $0x8c] sm:$0xf]
    %v52 = vld [vmem:[%s0 + $0x90] sm:$0xf]
    %v53 = vld [vmem:[%s0 + $0x94] sm:$0xf]
    %v54 = vld [vmem:[%s0 + $0x98] sm:$0xf]
    %v55 = vld [vmem:[%s0 + $0x9c] sm:$0xf]
    %v56 = vld [vmem:[%s0 + $0xa0] sm:$0xf]
    %v57 = vld [vmem:[%s0 + $0xa4] sm:$0xf]
    %v58 = vld [vmem:[%s0 + $0xa8] sm:$0xf]
    %v59 = vld [vmem:[%s0 + $0xac] sm:$0xf]
    %v60 = vld [vmem:[%s0 + $0xb0] sm:$0xf]
    %v61 = vld [vmem:[%s0 + $0xb4] sm:$0xf]
    %v62 = vld [vmem:[%s0 + $0xb8] sm:$0xf]
    %v63 = vld [vmem:[%s0 + $0xbc] sm:$0xf]
    %v64 = vld [vmem:[%s0 + $0xc0] sm:$0xf]
    %v65 = vld [vmem:[%s0 + $0xc4] sm:$0xf]
    %v66 = vld [vmem:[%s0 + $0xc8] sm:$0xf]
    %v67 = vld [vmem:[%s0 + $0xcc] sm:$0xf]
    %v68 = vld [vmem:[%s0 + $0xd0] sm:$0xf]
    %v69 = vld [vmem:[%s0 + $0xd4] sm:$0xf]
    %v70 = vld [vmem:[%s0 + $0xd8] sm:$0xf]
    %v71 = vld [vmem:[%s0 + $0xdc] sm:$0xf]
    %v72 = vld [vmem:[%s0 + $0xe0] sm:$0xf]
    %v73 = vld [vmem:[%s0 + $0xe4] sm:$0xf]
    %v74 = vld [vmem:[%s0 + $0xe8] sm:$0xf]
    %v75 = vld [vmem:[%s0 + $0xec] sm:$0xf]
    %v76 = vld [vmem:[%s0 + $0xf0] sm:$0xf]
    %v77 = vld [vmem:[%s0 + $0xf4] sm:$0xf]
    %v78 = vld [vmem:[%s0 + $0xf8] sm:$0xf]
    %v79 = vld [vmem:[%s0 + $0xfc] sm:$0xf]
    %v80 = vld [vmem:[%s1] sm:$0xf]
    %v81 = vld [vmem:[%s1 + $0x4] sm:$0x1]
    %v82 = vld [vmem:[%s2] sm:$0x1]
    %v84 = vlaneseq
    %v85 = vshrl.u32 %v84, 7
    %v86 = vsub.s32 0, %v85
    %v87 = vrot.slane %v82, %v86
    %v153 = vunpack.c.l.b16 %v16
    %v154 = vunpack.c.l.b16 %v17
    %v155 = vunpack.c.l.b16 %v18
    %v156 = vunpack.c.l.b16 %v19
    %v157 = vunpack.c.l.b16 %v20
    %v158 = vunpack.c.l.b16 %v21
    %v159 = vunpack.c.l.b16 %v22
    %v160 = vunpack.c.l.b16 %v23
    %v161 = vunpack.c.l.b16 %v24
    %v162 = vunpack.c.l.b16 %v25
    %v163 = vunpack.c.l.b16 %v26
    %v164 = vunpack.c.l.b16 %v27
    %v165 = vunpack.c.l.b16 %v28
    %v166 = vunpack.c.l.b16 %v29
    %v167 = vunpack.c.l.b16 %v30
    %v168 = vunpack.c.l.b16 %v31
    %v169 = vunpack.c.l.b16 %v32
    %v170 = vunpack.c.l.b16 %v33
    %v171 = vunpack.c.l.b16 %v34
    %v172 = vunpack.c.l.b16 %v35
    %v173 = vunpack.c.l.b16 %v36
    %v174 = vunpack.c.l.b16 %v37
    %v175 = vunpack.c.l.b16 %v38
    %v176 = vunpack.c.l.b16 %v39
    %v177 = vunpack.c.l.b16 %v40
    %v178 = vunpack.c.l.b16 %v41
    %v179 = vunpack.c.l.b16 %v42
    %v180 = vunpack.c.l.b16 %v43
    %v181 = vunpack.c.l.b16 %v44
    %v182 = vunpack.c.l.b16 %v45
    %v183 = vunpack.c.l.b16 %v46
    %v184 = vunpack.c.l.b16 %v47
    %v185 = vunpack.c.l.b16 %v48
    %v186 = vunpack.c.l.b16 %v49
    %v187 = vunpack.c.l.b16 %v50
    %v188 = vunpack.c.l.b16 %v51
    %v189 = vunpack.c.l.b16 %v52
    %v190 = vunpack.c.l.b16 %v53
    %v191 = vunpack.c.l.b16 %v54
    %v192 = vunpack.c.l.b16 %v55
    %v193 = vunpack.c.l.b16 %v56
    %v194 = vunpack.c.l.b16 %v57
    %v195 = vunpack.c.l.b16 %v58
    %v196 = vunpack.c.l.b16 %v59
    %v197 = vunpack.c.l.b16 %v60
    %v198 = vunpack.c.l.b16 %v61
    %v199 = vunpack.c.l.b16 %v62
    %v200 = vunpack.c.l.b16 %v63
    %v201 = vunpack.c.l.b16 %v64
    %v202 = vunpack.c.l.b16 %v65
    %v203 = vunpack.c.l.b16 %v66
    %v204 = vunpack.c.l.b16 %v67
    %v205 = vunpack.c.l.b16 %v68
    %v206 = vunpack.c.l.b16 %v69
    %v207 = vunpack.c.l.b16 %v70
    %v208 = vunpack.c.l.b16 %v71
    %v209 = vunpack.c.l.b16 %v72
    %v210 = vunpack.c.l.b16 %v73
    %v211 = vunpack.c.l.b16 %v74
    %v212 = vunpack.c.l.b16 %v75
    %v213 = vunpack.c.l.b16 %v76
    %v214 = vunpack.c.l.b16 %v77
    %v215 = vunpack.c.l.b16 %v78
    %v216 = vunpack.c.l.b16 %v79
    %v217 = vpack.c.b16 %v154, %v153
    %v218 = vpack.c.b16 %v156, %v155
    %v219 = vpack.c.b16 %v158, %v157
    %v220 = vpack.c.b16 %v160, %v159
    %v221 = vpack.c.b16 %v162, %v161
    %v222 = vpack.c.b16 %v164, %v163
    %v223 = vpack.c.b16 %v166, %v165
    %v224 = vpack.c.b16 %v168, %v167
    %v225 = vpack.c.b16 %v170, %v169
    %v226 = vpack.c.b16 %v172, %v171
    %v227 = vpack.c.b16 %v174, %v173
    %v228 = vpack.c.b16 %v176, %v175
    %v229 = vpack.c.b16 %v178, %v177
    %v230 = vpack.c.b16 %v180, %v179
    %v231 = vpack.c.b16 %v182, %v181
    %v232 = vpack.c.b16 %v184, %v183
    %v233 = vpack.c.b16 %v186, %v185
    %v234 = vpack.c.b16 %v188, %v187
    %v235 = vpack.c.b16 %v190, %v189
    %v236 = vpack.c.b16 %v192, %v191
    %v237 = vpack.c.b16 %v194, %v193
    %v238 = vpack.c.b16 %v196, %v195
    %v239 = vpack.c.b16 %v198, %v197
    %v240 = vpack.c.b16 %v200, %v199
    %v241 = vpack.c.b16 %v202, %v201
    %v242 = vpack.c.b16 %v204, %v203
    %v243 = vpack.c.b16 %v206, %v205
    %v244 = vpack.c.b16 %v208, %v207
    %v245 = vpack.c.b16 %v210, %v209
    %v246 = vpack.c.b16 %v212, %v211
    %v247 = vpack.c.b16 %v214, %v213
    %v248 = vpack.c.b16 %v216, %v215
    %v251 = vunpack.c.l.b16 %v80
    %v252 = vunpack.c.l.b16 %v81
    %v253 = vpack.c.b16 %v252, %v251
    %vm254 = vcmask 72704
    %v256 = vsel %vm254, %v217, 0
    %v259 = vsel %vm254, %v218, 0
    %v262 = vsel %vm254, %v219, 0
    %v265 = vsel %vm254, %v220, 0
    %v268 = vsel %vm254, %v221, 0
    %v271 = vsel %vm254, %v222, 0
    %v274 = vsel %vm254, %v223, 0
    %v277 = vsel %vm254, %v224, 0
    %v280 = vsel %vm254, %v225, 0
    %v283 = vsel %vm254, %v226, 0
    %v286 = vsel %vm254, %v227, 0
    %v289 = vsel %vm254, %v228, 0
    %v292 = vsel %vm254, %v229, 0
    %v295 = vsel %vm254, %v230, 0
    %v298 = vsel %vm254, %v231, 0
    %v301 = vsel %vm254, %v232, 0
    %v304 = vsel %vm254, %v233, 0
    %v307 = vsel %vm254, %v234, 0
    %v310 = vsel %vm254, %v235, 0
    %v313 = vsel %vm254, %v236, 0
    %v316 = vsel %vm254, %v237, 0
    %v319 = vsel %vm254, %v238, 0
    %v322 = vsel %vm254, %v239, 0
    %v325 = vsel %vm254, %v240, 0
    %v328 = vsel %vm254, %v241, 0
    %v331 = vsel %vm254, %v242, 0
    %v334 = vsel %vm254, %v243, 0
    %v337 = vsel %vm254, %v244, 0
    %v340 = vsel %vm254, %v245, 0
    %v343 = vsel %vm254, %v246, 0
    %v346 = vsel %vm254, %v247, 0
    %v349 = vsel %vm254, %v248, 0
    %vm351 = vcmask 1043456
    %vm352 = vcmask 1044480
    %v353 = vsel %vm351, 4294967295, 65535
    %v354 = vsel %vm352, %v353, 0
    %v356 = vand.u32 %v253, %v354
    %358 = vmatprep.subr.bf16.mxu0 0
    %359 = vmatpush1.bf16.msra.mxu0 0
    %360 = vmatprep.subr.bf16.mxu0 0
    %361 = vmatpush1.bf16.msra.mxu0 0
    %362 = vmatprep.subr.bf16.mxu0 0
    %363 = vmatpush1.bf16.msra.mxu0 0
    %364 = vmatprep.subr.bf16.mxu0 0
    %365 = vmatpush1.bf16.msra.mxu0 0
    %366 = vmatprep.subr.bf16.mxu0 0
    %367 = vmatpush1.bf16.msra.mxu0 0
    %368 = vmatprep.subr.bf16.mxu0 0
    %369 = vmatpush1.bf16.msra.mxu0 0
    %370 = vmatprep.subr.bf16.mxu0 0
    %371 = vmatpush1.bf16.msra.mxu0 0
    %372 = vmatprep.subr.bf16.mxu0 0
    %373 = vmatpush1.bf16.msra.mxu0 %v356
    %374 = vmatprep.subr.bf16.mxu0 0
    %375 = vmatpush2.bf16.msra.mxu0 0
    %376 = vmatprep.subr.bf16.mxu0 0
    %377 = vmatpush2.bf16.msra.mxu0 0
    %378 = vmatprep.subr.bf16.mxu0 0
    %379 = vmatpush2.bf16.msra.mxu0 0
    %380 = vmatprep.subr.bf16.mxu0 0
    %381 = vmatpush2.bf16.msra.mxu0 0
    %382 = vmatprep.subr.bf16.mxu0 0
    %383 = vmatpush2.bf16.msra.mxu0 0
    %384 = vmatprep.subr.bf16.mxu0 0
    %385 = vmatpush2.bf16.msra.mxu0 0
    %386 = vmatprep.subr.bf16.mxu0 0
    %387 = vmatpush2.bf16.msra.mxu0 0
    %388 = vmatprep.subr.bf16.mxu0 0
    %389 = vmatpush2.bf16.msra.mxu0 0
    %390 = vmatprep.mubr.bf16.mxu0 0
    %391 = vmatmul.mubr.bf16.gmra.mxu0 %v256
    %v392 = vpop.f32.mrf.mxu0
    %v393 = vadd.f32 %v87, %v392
    %v394 = vpop.f32.mrf.mxu0
    %v395 = vpop.f32.mrf.mxu0
    %v396 = vadd.f32 %v87, %v395
    %v397 = vpop.f32.mrf.mxu0
    %398 = vmatprep.mubr.bf16.mxu0 0
    %399 = vmatmul.mubr.bf16.gmra.mxu0 %v259
    %v400 = vpop.f32.mrf.mxu0
    %v401 = vadd.f32 %v87, %v400
    %v402 = vpop.f32.mrf.mxu0
    %v403 = vpop.f32.mrf.mxu0
    %v404 = vadd.f32 %v87, %v403
    %v405 = vpop.f32.mrf.mxu0
    %406 = vmatprep.mubr.bf16.mxu0 0
    %407 = vmatmul.mubr.bf16.gmra.mxu0 %v262
    %v408 = vpop.f32.mrf.mxu0
    %v409 = vadd.f32 %v87, %v408
    %v410 = vpop.f32.mrf.mxu0
    %v411 = vpop.f32.mrf.mxu0
    %v412 = vadd.f32 %v87, %v411
    %v413 = vpop.f32.mrf.mxu0
    %414 = vmatprep.mubr.bf16.mxu0 0
    %415 = vmatmul.mubr.bf16.gmra.mxu0 %v265
    %v416 = vpop.f32.mrf.mxu0
    %v417 = vadd.f32 %v87, %v416
    %v418 = vpop.f32.mrf.mxu0
    %v419 = vpop.f32.mrf.mxu0
    %v420 = vadd.f32 %v87, %v419
    %v421 = vpop.f32.mrf.mxu0
    %422 = vmatprep.mubr.bf16.mxu0 0
    %423 = vmatmul.mubr.bf16.gmra.mxu0 %v268
    %v424 = vpop.f32.mrf.mxu0
    %v425 = vadd.f32 %v87, %v424
    %v426 = vpop.f32.mrf.mxu0
    %v427 = vpop.f32.mrf.mxu0
    %v428 = vadd.f32 %v87, %v427
    %v429 = vpop.f32.mrf.mxu0
    %430 = vmatprep.mubr.bf16.mxu0 0
    %431 = vmatmul.mubr.bf16.gmra.mxu0 %v271
    %v432 = vpop.f32.mrf.mxu0
    %v433 = vadd.f32 %v87, %v432
    %v434 = vpop.f32.mrf.mxu0
    %v435 = vpop.f32.mrf.mxu0
    %v436 = vadd.f32 %v87, %v435
    %v437 = vpop.f32.mrf.mxu0
    %438 = vmatprep.mubr.bf16.mxu0 0
    %439 = vmatmul.mubr.bf16.gmra.mxu0 %v274
    %v440 = vpop.f32.mrf.mxu0
    %v441 = vadd.f32 %v87, %v440
    %v442 = vpop.f32.mrf.mxu0
    %v443 = vpop.f32.mrf.mxu0
    %v444 = vadd.f32 %v87, %v443
    %v445 = vpop.f32.mrf.mxu0
    %446 = vmatprep.mubr.bf16.mxu0 0
    %447 = vmatmul.mubr.bf16.gmra.mxu0 %v277
    %v448 = vpop.f32.mrf.mxu0
    %v449 = vadd.f32 %v87, %v448
    %v450 = vpop.f32.mrf.mxu0
    %v451 = vpop.f32.mrf.mxu0
    %v452 = vadd.f32 %v87, %v451
    %v453 = vpop.f32.mrf.mxu0
    %454 = vmatprep.mubr.bf16.mxu0 0
    %455 = vmatmul.mubr.bf16.gmra.mxu0 %v280
    %v456 = vpop.f32.mrf.mxu0
    %v457 = vadd.f32 %v87, %v456
    %v458 = vpop.f32.mrf.mxu0
    %v459 = vpop.f32.mrf.mxu0
    %v460 = vadd.f32 %v87, %v459
    %v461 = vpop.f32.mrf.mxu0
    %462 = vmatprep.mubr.bf16.mxu0 0
    %463 = vmatmul.mubr.bf16.gmra.mxu0 %v283
    %v464 = vpop.f32.mrf.mxu0
    %v465 = vadd.f32 %v87, %v464
    %v466 = vpop.f32.mrf.mxu0
    %v467 = vpop.f32.mrf.mxu0
    %v468 = vadd.f32 %v87, %v467
    %v469 = vpop.f32.mrf.mxu0
    %470 = vmatprep.mubr.bf16.mxu0 0
    %471 = vmatmul.mubr.bf16.gmra.mxu0 %v286
    %v472 = vpop.f32.mrf.mxu0
    %v473 = vadd.f32 %v87, %v472
    %v474 = vpop.f32.mrf.mxu0
    %v475 = vpop.f32.mrf.mxu0
    %v476 = vadd.f32 %v87, %v475
    %v477 = vpop.f32.mrf.mxu0
    %478 = vmatprep.mubr.bf16.mxu0 0
    %479 = vmatmul.mubr.bf16.gmra.mxu0 %v289
    %v480 = vpop.f32.mrf.mxu0
    %v481 = vadd.f32 %v87, %v480
    %v482 = vpop.f32.mrf.mxu0
    %v483 = vpop.f32.mrf.mxu0
    %v484 = vadd.f32 %v87, %v483
    %v485 = vpop.f32.mrf.mxu0
    %486 = vmatprep.mubr.bf16.mxu0 0
    %487 = vmatmul.mubr.bf16.gmra.mxu0 %v292
    %v488 = vpop.f32.mrf.mxu0
    %v489 = vadd.f32 %v87, %v488
    %v490 = vpop.f32.mrf.mxu0
    %v491 = vpop.f32.mrf.mxu0
    %v492 = vadd.f32 %v87, %v491
    %v493 = vpop.f32.mrf.mxu0
    %494 = vmatprep.mubr.bf16.mxu0 0
    %495 = vmatmul.mubr.bf16.gmra.mxu0 %v295
    %v496 = vpop.f32.mrf.mxu0
    %v497 = vadd.f32 %v87, %v496
    %v498 = vpop.f32.mrf.mxu0
    %v499 = vpop.f32.mrf.mxu0
    %v500 = vadd.f32 %v87, %v499
    %v501 = vpop.f32.mrf.mxu0
    %502 = vmatprep.mubr.bf16.mxu0 0
    %503 = vmatmul.mubr.bf16.gmra.mxu0 %v298
    %v504 = vpop.f32.mrf.mxu0
    %v505 = vadd.f32 %v87, %v504
    %v506 = vpop.f32.mrf.mxu0
    %v507 = vpop.f32.mrf.mxu0
    %v508 = vadd.f32 %v87, %v507
    %v509 = vpop.f32.mrf.mxu0
    %510 = vmatprep.mubr.bf16.mxu0 0
    %511 = vmatmul.mubr.bf16.gmra.mxu0 %v301
    %v512 = vpop.f32.mrf.mxu0
    %v513 = vadd.f32 %v87, %v512
    %v514 = vpop.f32.mrf.mxu0
    %v515 = vpop.f32.mrf.mxu0
    %v516 = vadd.f32 %v87, %v515
    %v517 = vpop.f32.mrf.mxu0
    %518 = vmatprep.mubr.bf16.mxu0 0
    %519 = vmatmul.mubr.bf16.gmra.mxu0 %v304
    %v520 = vpop.f32.mrf.mxu0
    %v521 = vadd.f32 %v87, %v520
    %v522 = vpop.f32.mrf.mxu0
    %v523 = vpop.f32.mrf.mxu0
    %v524 = vadd.f32 %v87, %v523
    %v525 = vpop.f32.mrf.mxu0
    %526 = vmatprep.mubr.bf16.mxu0 0
    %527 = vmatmul.mubr.bf16.gmra.mxu0 %v307
    %v528 = vpop.f32.mrf.mxu0
    %v529 = vadd.f32 %v87, %v528
    %v530 = vpop.f32.mrf.mxu0
    %v531 = vpop.f32.mrf.mxu0
    %v532 = vadd.f32 %v87, %v531
    %v533 = vpop.f32.mrf.mxu0
    %534 = vmatprep.mubr.bf16.mxu0 0
    %535 = vmatmul.mubr.bf16.gmra.mxu0 %v310
    %v536 = vpop.f32.mrf.mxu0
    %v537 = vadd.f32 %v87, %v536
    %v538 = vpop.f32.mrf.mxu0
    %v539 = vpop.f32.mrf.mxu0
    %v540 = vadd.f32 %v87, %v539
    %v541 = vpop.f32.mrf.mxu0
    %542 = vmatprep.mubr.bf16.mxu0 0
    %543 = vmatmul.mubr.bf16.gmra.mxu0 %v313
    %v544 = vpop.f32.mrf.mxu0
    %v545 = vadd.f32 %v87, %v544
    %v546 = vpop.f32.mrf.mxu0
    %v547 = vpop.f32.mrf.mxu0
    %v548 = vadd.f32 %v87, %v547
    %v549 = vpop.f32.mrf.mxu0
    %550 = vmatprep.mubr.bf16.mxu0 0
    %551 = vmatmul.mubr.bf16.gmra.mxu0 %v316
    %v552 = vpop.f32.mrf.mxu0
    %v553 = vadd.f32 %v87, %v552
    %v554 = vpop.f32.mrf.mxu0
    %v555 = vpop.f32.mrf.mxu0
    %v556 = vadd.f32 %v87, %v555
    %v557 = vpop.f32.mrf.mxu0
    %558 = vmatprep.mubr.bf16.mxu0 0
    %559 = vmatmul.mubr.bf16.gmra.mxu0 %v319
    %v560 = vpop.f32.mrf.mxu0
    %v561 = vadd.f32 %v87, %v560
    %v562 = vpop.f32.mrf.mxu0
    %v563 = vpop.f32.mrf.mxu0
    %v564 = vadd.f32 %v87, %v563
    %v565 = vpop.f32.mrf.mxu0
    %566 = vmatprep.mubr.bf16.mxu0 0
    %567 = vmatmul.mubr.bf16.gmra.mxu0 %v322
    %v568 = vpop.f32.mrf.mxu0
    %v569 = vadd.f32 %v87, %v568
    %v570 = vpop.f32.mrf.mxu0
    %v571 = vpop.f32.mrf.mxu0
    %v572 = vadd.f32 %v87, %v571
    %v573 = vpop.f32.mrf.mxu0
    %574 = vmatprep.mubr.bf16.mxu0 0
    %575 = vmatmul.mubr.bf16.gmra.mxu0 %v325
    %v576 = vpop.f32.mrf.mxu0
    %v577 = vadd.f32 %v87, %v576
    %v578 = vpop.f32.mrf.mxu0
    %v579 = vpop.f32.mrf.mxu0
    %v580 = vadd.f32 %v87, %v579
    %v581 = vpop.f32.mrf.mxu0
    %582 = vmatprep.mubr.bf16.mxu0 0
    %583 = vmatmul.mubr.bf16.gmra.mxu0 %v328
    %v584 = vpop.f32.mrf.mxu0
    %v585 = vadd.f32 %v87, %v584
    %v586 = vpop.f32.mrf.mxu0
    %v587 = vpop.f32.mrf.mxu0
    %v588 = vadd.f32 %v87, %v587
    %v589 = vpop.f32.mrf.mxu0
    %590 = vmatprep.mubr.bf16.mxu0 0
    %591 = vmatmul.mubr.bf16.gmra.mxu0 %v331
    %v592 = vpop.f32.mrf.mxu0
    %v593 = vadd.f32 %v87, %v592
    %v594 = vpop.f32.mrf.mxu0
    %v595 = vpop.f32.mrf.mxu0
    %v596 = vadd.f32 %v87, %v595
    %v597 = vpop.f32.mrf.mxu0
    %598 = vmatprep.mubr.bf16.mxu0 0
    %599 = vmatmul.mubr.bf16.gmra.mxu0 %v334
    %v600 = vpop.f32.mrf.mxu0
    %v601 = vadd.f32 %v87, %v600
    %v602 = vpop.f32.mrf.mxu0
    %v603 = vpop.f32.mrf.mxu0
    %v604 = vadd.f32 %v87, %v603
    %v605 = vpop.f32.mrf.mxu0
    %606 = vmatprep.mubr.bf16.mxu0 0
    %607 = vmatmul.mubr.bf16.gmra.mxu0 %v337
    %v608 = vpop.f32.mrf.mxu0
    %v609 = vadd.f32 %v87, %v608
    %v610 = vpop.f32.mrf.mxu0
    %v611 = vpop.f32.mrf.mxu0
    %v612 = vadd.f32 %v87, %v611
    %v613 = vpop.f32.mrf.mxu0
    %614 = vmatprep.mubr.bf16.mxu0 0
    %615 = vmatmul.mubr.bf16.gmra.mxu0 %v340
    %v616 = vpop.f32.mrf.mxu0
    %v617 = vadd.f32 %v87, %v616
    %v618 = vpop.f32.mrf.mxu0
    %v619 = vpop.f32.mrf.mxu0
    %v620 = vadd.f32 %v87, %v619
    %v621 = vpop.f32.mrf.mxu0
    %622 = vmatprep.mubr.bf16.mxu0 0
    %623 = vmatmul.mubr.bf16.gmra.mxu0 %v343
    %v624 = vpop.f32.mrf.mxu0
    %v625 = vadd.f32 %v87, %v624
    %v626 = vpop.f32.mrf.mxu0
    %v627 = vpop.f32.mrf.mxu0
    %v628 = vadd.f32 %v87, %v627
    %v629 = vpop.f32.mrf.mxu0
    %630 = vmatprep.mubr.bf16.mxu0 0
    %631 = vmatmul.mubr.bf16.gmra.mxu0 %v346
    %v632 = vpop.f32.mrf.mxu0
    %v633 = vadd.f32 %v87, %v632
    %v634 = vpop.f32.mrf.mxu0
    %v635 = vpop.f32.mrf.mxu0
    %v636 = vadd.f32 %v87, %v635
    %v637 = vpop.f32.mrf.mxu0
    %638 = vmatprep.mubr.bf16.mxu0 0
    %639 = vmatmul.mubr.bf16.gmra.mxu0 %v349
    %v640 = vpop.f32.mrf.mxu0
    %v641 = vadd.f32 %v87, %v640
    %v642 = vpop.f32.mrf.mxu0
    %v643 = vpop.f32.mrf.mxu0
    %v644 = vadd.f32 %v87, %v643
    %v645 = vpop.f32.mrf.mxu0
    %646 = vdwg.mxu0
    %vm647 = vcmp.gt.f32.partialorder %v393, 0.0
    %vm648 = vcmp.gt.f32.partialorder %v396, 0.0
    %vm649 = vcmp.gt.f32.partialorder %v401, 0.0
    %vm650 = vcmp.gt.f32.partialorder %v404, 0.0
    %vm651 = vcmp.gt.f32.partialorder %v409, 0.0
    %vm652 = vcmp.gt.f32.partialorder %v412, 0.0
    %vm653 = vcmp.gt.f32.partialorder %v417, 0.0
    %vm654 = vcmp.gt.f32.partialorder %v420, 0.0
    %vm655 = vcmp.gt.f32.partialorder %v425, 0.0
    %vm656 = vcmp.gt.f32.partialorder %v428, 0.0
    %vm657 = vcmp.gt.f32.partialorder %v433, 0.0
    %vm658 = vcmp.gt.f32.partialorder %v436, 0.0
    %vm659 = vcmp.gt.f32.partialorder %v441, 0.0
    %vm660 = vcmp.gt.f32.partialorder %v444, 0.0
    %vm661 = vcmp.gt.f32.partialorder %v449, 0.0
    %vm662 = vcmp.gt.f32.partialorder %v452, 0.0
    %vm663 = vcmp.gt.f32.partialorder %v457, 0.0
    %vm664 = vcmp.gt.f32.partialorder %v460, 0.0
    %vm665 = vcmp.gt.f32.partialorder %v465, 0.0
    %vm666 = vcmp.gt.f32.partialorder %v468, 0.0
    %vm667 = vcmp.gt.f32.partialorder %v473, 0.0
    %vm668 = vcmp.gt.f32.partialorder %v476, 0.0
    %vm669 = vcmp.gt.f32.partialorder %v481, 0.0
    %vm670 = vcmp.gt.f32.partialorder %v484, 0.0
    %vm671 = vcmp.gt.f32.partialorder %v489, 0.0
    %vm672 = vcmp.gt.f32.partialorder %v492, 0.0
    %vm673 = vcmp.gt.f32.partialorder %v497, 0.0
    %vm674 = vcmp.gt.f32.partialorder %v500, 0.0
    %vm675 = vcmp.gt.f32.partialorder %v505, 0.0
    %vm676 = vcmp.gt.f32.partialorder %v508, 0.0
    %vm677 = vcmp.gt.f32.partialorder %v513, 0.0
    %vm678 = vcmp.gt.f32.partialorder %v516, 0.0
    %vm679 = vcmp.gt.f32.partialorder %v521, 0.0
    %vm680 = vcmp.gt.f32.partialorder %v524, 0.0
    %vm681 = vcmp.gt.f32.partialorder %v529, 0.0
    %vm682 = vcmp.gt.f32.partialorder %v532, 0.0
    %vm683 = vcmp.gt.f32.partialorder %v537, 0.0
    %vm684 = vcmp.gt.f32.partialorder %v540, 0.0
    %vm685 = vcmp.gt.f32.partialorder %v545, 0.0
    %vm686 = vcmp.gt.f32.partialorder %v548, 0.0
    %vm687 = vcmp.gt.f32.partialorder %v553, 0.0
    %vm688 = vcmp.gt.f32.partialorder %v556, 0.0
    %vm689 = vcmp.gt.f32.partialorder %v561, 0.0
    %vm690 = vcmp.gt.f32.partialorder %v564, 0.0
    %vm691 = vcmp.gt.f32.partialorder %v569, 0.0
    %vm692 = vcmp.gt.f32.partialorder %v572, 0.0
    %vm693 = vcmp.gt.f32.partialorder %v577, 0.0
    %vm694 = vcmp.gt.f32.partialorder %v580, 0.0
    %vm695 = vcmp.gt.f32.partialorder %v585, 0.0
    %vm696 = vcmp.gt.f32.partialorder %v588, 0.0
    %vm697 = vcmp.gt.f32.partialorder %v593, 0.0
    %vm698 = vcmp.gt.f32.partialorder %v596, 0.0
    %vm699 = vcmp.gt.f32.partialorder %v601, 0.0
    %vm700 = vcmp.gt.f32.partialorder %v604, 0.0
    %vm701 = vcmp.gt.f32.partialorder %v609, 0.0
    %vm702 = vcmp.gt.f32.partialorder %v612, 0.0
    %vm703 = vcmp.gt.f32.partialorder %v617, 0.0
    %vm704 = vcmp.gt.f32.partialorder %v620, 0.0
    %vm705 = vcmp.gt.f32.partialorder %v625, 0.0
    %vm706 = vcmp.gt.f32.partialorder %v628, 0.0
    %vm707 = vcmp.gt.f32.partialorder %v633, 0.0
    %vm708 = vcmp.gt.f32.partialorder %v636, 0.0
    %vm709 = vcmp.gt.f32.partialorder %v641, 0.0
    %vm710 = vcmp.gt.f32.partialorder %v644, 0.0
    %v711 = vmul.f32 %v393, 0.01
    %v712 = vmul.f32 %v396, 0.01
    %v713 = vmul.f32 %v401, 0.01
    %v714 = vmul.f32 %v404, 0.01
    %v715 = vmul.f32 %v409, 0.01
    %v716 = vmul.f32 %v412, 0.01
    %v717 = vmul.f32 %v417, 0.01
    %v718 = vmul.f32 %v420, 0.01
    %v719 = vmul.f32 %v425, 0.01
    %v720 = vmul.f32 %v428, 0.01
    %v721 = vmul.f32 %v433, 0.01
    %v722 = vmul.f32 %v436, 0.01
    %v723 = vmul.f32 %v441, 0.01
    %v724 = vmul.f32 %v444, 0.01
    %v725 = vmul.f32 %v449, 0.01
    %v726 = vmul.f32 %v452, 0.01
    %v727 = vmul.f32 %v457, 0.01
    %v728 = vmul.f32 %v460, 0.01
    %v729 = vmul.f32 %v465, 0.01
    %v730 = vmul.f32 %v468, 0.01
    %v731 = vmul.f32 %v473, 0.01
    %v732 = vmul.f32 %v476, 0.01
    %v733 = vmul.f32 %v481, 0.01
    %v734 = vmul.f32 %v484, 0.01
    %v735 = vmul.f32 %v489, 0.01
    %v736 = vmul.f32 %v492, 0.01
    %v737 = vmul.f32 %v497, 0.01
    %v738 = vmul.f32 %v500, 0.01
    %v739 = vmul.f32 %v505, 0.01
    %v740 = vmul.f32 %v508, 0.01
    %v741 = vmul.f32 %v513, 0.01
    %v742 = vmul.f32 %v516, 0.01
    %v743 = vmul.f32 %v521, 0.01
    %v744 = vmul.f32 %v524, 0.01
    %v745 = vmul.f32 %v529, 0.01
    %v746 = vmul.f32 %v532, 0.01
    %v747 = vmul.f32 %v537, 0.01
    %v748 = vmul.f32 %v540, 0.01
    %v749 = vmul.f32 %v545, 0.01
    %v750 = vmul.f32 %v548, 0.01
    %v751 = vmul.f32 %v553, 0.01
    %v752 = vmul.f32 %v556, 0.01
    %v753 = vmul.f32 %v561, 0.01
    %v754 = vmul.f32 %v564, 0.01
    %v755 = vmul.f32 %v569, 0.01
    %v756 = vmul.f32 %v572, 0.01
    %v757 = vmul.f32 %v577, 0.01
    %v758 = vmul.f32 %v580, 0.01
    %v759 = vmul.f32 %v585, 0.01
    %v760 = vmul.f32 %v588, 0.01
    %v761 = vmul.f32 %v593, 0.01
    %v762 = vmul.f32 %v596, 0.01
    %v763 = vmul.f32 %v601, 0.01
    %v764 = vmul.f32 %v604, 0.01
    %v765 = vmul.f32 %v609, 0.01
    %v766 = vmul.f32 %v612, 0.01
    %v767 = vmul.f32 %v617, 0.01
    %v768 = vmul.f32 %v620, 0.01
    %v769 = vmul.f32 %v625, 0.01
    %v770 = vmul.f32 %v628, 0.01
    %v771 = vmul.f32 %v633, 0.01
    %v772 = vmul.f32 %v636, 0.01
    %v773 = vmul.f32 %v641, 0.01
    %v774 = vmul.f32 %v644, 0.01
    %v775 = vsel %vm647, %v393, %v711
    %v776 = vsel %vm648, %v396, %v712
    %v777 = vsel %vm649, %v401, %v713
    %v778 = vsel %vm650, %v404, %v714
    %v779 = vsel %vm651, %v409, %v715
    %v780 = vsel %vm652, %v412, %v716
    %v781 = vsel %vm653, %v417, %v717
    %v782 = vsel %vm654, %v420, %v718
    %v783 = vsel %vm655, %v425, %v719
    %v784 = vsel %vm656, %v428, %v720
    %v785 = vsel %vm657, %v433, %v721
    %v786 = vsel %vm658, %v436, %v722
    %v787 = vsel %vm659, %v441, %v723
    %v788 = vsel %vm660, %v444, %v724
    %v789 = vsel %vm661, %v449, %v725
    %v790 = vsel %vm662, %v452, %v726
    %v791 = vsel %vm663, %v457, %v727
    %v792 = vsel %vm664, %v460, %v728
    %v793 = vsel %vm665, %v465, %v729
    %v794 = vsel %vm666, %v468, %v730
    %v795 = vsel %vm667, %v473, %v731
    %v796 = vsel %vm668, %v476, %v732
    %v797 = vsel %vm669, %v481, %v733
    %v798 = vsel %vm670, %v484, %v734
    %v799 = vsel %vm671, %v489, %v735
    %v800 = vsel %vm672, %v492, %v736
    %v801 = vsel %vm673, %v497, %v737
    %v802 = vsel %vm674, %v500, %v738
    %v803 = vsel %vm675, %v505, %v739
    %v804 = vsel %vm676, %v508, %v740
    %v805 = vsel %vm677, %v513, %v741
    %v806 = vsel %vm678, %v516, %v742
    %v807 = vsel %vm679, %v521, %v743
    %v808 = vsel %vm680, %v524, %v744
    %v809 = vsel %vm681, %v529, %v745
    %v810 = vsel %vm682, %v532, %v746
    %v811 = vsel %vm683, %v537, %v747
    %v812 = vsel %vm684, %v540, %v748
    %v813 = vsel %vm685, %v545, %v749
    %v814 = vsel %vm686, %v548, %v750
    %v815 = vsel %vm687, %v553, %v751
    %v816 = vsel %vm688, %v556, %v752
    %v817 = vsel %vm689, %v561, %v753
    %v818 = vsel %vm690, %v564, %v754
    %v819 = vsel %vm691, %v569, %v755
    %v820 = vsel %vm692, %v572, %v756
    %v821 = vsel %vm693, %v577, %v757
    %v822 = vsel %vm694, %v580, %v758
    %v823 = vsel %vm695, %v585, %v759
    %v824 = vsel %vm696, %v588, %v760
    %v825 = vsel %vm697, %v593, %v761
    %v826 = vsel %vm698, %v596, %v762
    %v827 = vsel %vm699, %v601, %v763
    %v828 = vsel %vm700, %v604, %v764
    %v829 = vsel %vm701, %v609, %v765
    %v830 = vsel %vm702, %v612, %v766
    %v831 = vsel %vm703, %v617, %v767
    %v832 = vsel %vm704, %v620, %v768
    %v833 = vsel %vm705, %v625, %v769
    %v834 = vsel %vm706, %v628, %v770
    %v835 = vsel %vm707, %v633, %v771
    %v836 = vsel %vm708, %v636, %v772
    %v837 = vsel %vm709, %v641, %v773
    %v838 = vsel %vm710, %v644, %v774
    %839 = vst [vmem:[#allocation2] sm:$0xff] %v775
    %840 = vst [vmem:[#allocation2 + $0x8] sm:$0xff] %v776
    %841 = vst [vmem:[#allocation2 + $0x10] sm:$0xff] %v777
    %842 = vst [vmem:[#allocation2 + $0x18] sm:$0xff] %v778
    %843 = vst [vmem:[#allocation2 + $0x20] sm:$0xff] %v779
    %844 = vst [vmem:[#allocation2 + $0x28] sm:$0xff] %v780
    %845 = vst [vmem:[#allocation2 + $0x30] sm:$0xff] %v781
    %846 = vst [vmem:[#allocation2 + $0x38] sm:$0xff] %v782
    %847 = vst [vmem:[#allocation2 + $0x40] sm:$0xff] %v783
    %848 = vst [vmem:[#allocation2 + $0x48] sm:$0xff] %v784
    %849 = vst [vmem:[#allocation2 + $0x50] sm:$0xff] %v785
    %850 = vst [vmem:[#allocation2 + $0x58] sm:$0xff] %v786
    %851 = vst [vmem:[#allocation2 + $0x60] sm:$0xff] %v787
    %852 = vst [vmem:[#allocation2 + $0x68] sm:$0xff] %v788
    %853 = vst [vmem:[#allocation2 + $0x70] sm:$0xff] %v789
    %854 = vst [vmem:[#allocation2 + $0x78] sm:$0xff] %v790
    %855 = vst [vmem:[#allocation2 + $0x80] sm:$0xff] %v791
    %856 = vst [vmem:[#allocation2 + $0x88] sm:$0xff] %v792
    %857 = vst [vmem:[#allocation2 + $0x90] sm:$0xff] %v793
    %858 = vst [vmem:[#allocation2 + $0x98] sm:$0xff] %v794
    %859 = vst [vmem:[#allocation2 + $0xa0] sm:$0xff] %v795
    %860 = vst [vmem:[#allocation2 + $0xa8] sm:$0xff] %v796
    %861 = vst [vmem:[#allocation2 + $0xb0] sm:$0xff] %v797
    %862 = vst [vmem:[#allocation2 + $0xb8] sm:$0xff] %v798
    %863 = vst [vmem:[#allocation2 + $0xc0] sm:$0xff] %v799
    %864 = vst [vmem:[#allocation2 + $0xc8] sm:$0xff] %v800
    %865 = vst [vmem:[#allocation2 + $0xd0] sm:$0xff] %v801
    %866 = vst [vmem:[#allocation2 + $0xd8] sm:$0xff] %v802
    %867 = vst [vmem:[#allocation2 + $0xe0] sm:$0xff] %v803
    %868 = vst [vmem:[#allocation2 + $0xe8] sm:$0xff] %v804
    %869 = vst [vmem:[#allocation2 + $0xf0] sm:$0xff] %v805
    %870 = vst [vmem:[#allocation2 + $0xf8] sm:$0xff] %v806
    %871 = vst [vmem:[#allocation2 + $0x100] sm:$0xff] %v807
    %872 = vst [vmem:[#allocation2 + $0x108] sm:$0xff] %v808
    %873 = vst [vmem:[#allocation2 + $0x110] sm:$0xff] %v809
    %874 = vst [vmem:[#allocation2 + $0x118] sm:$0xff] %v810
    %875 = vst [vmem:[#allocation2 + $0x120] sm:$0xff] %v811
    %876 = vst [vmem:[#allocation2 + $0x128] sm:$0xff] %v812
    %877 = vst [vmem:[#allocation2 + $0x130] sm:$0xff] %v813
    %878 = vst [vmem:[#allocation2 + $0x138] sm:$0xff] %v814
    %879 = vst [vmem:[#allocation2 + $0x140] sm:$0xff] %v815
    %880 = vst [vmem:[#allocation2 + $0x148] sm:$0xff] %v816
    %881 = vst [vmem:[#allocation2 + $0x150] sm:$0xff] %v817
    %882 = vst [vmem:[#allocation2 + $0x158] sm:$0xff] %v818
    %883 = vst [vmem:[#allocation2 + $0x160] sm:$0xff] %v819
    %884 = vst [vmem:[#allocation2 + $0x168] sm:$0xff] %v820
    %885 = vst [vmem:[#allocation2 + $0x170] sm:$0xff] %v821
    %886 = vst [vmem:[#allocation2 + $0x178] sm:$0xff] %v822
    %887 = vst [vmem:[#allocation2 + $0x180] sm:$0xff] %v823
    %888 = vst [vmem:[#allocation2 + $0x188] sm:$0xff] %v824
    %889 = vst [vmem:[#allocation2 + $0x190] sm:$0xff] %v825
    %890 = vst [vmem:[#allocation2 + $0x198] sm:$0xff] %v826
    %891 = vst [vmem:[#allocation2 + $0x1a0] sm:$0xff] %v827
    %892 = vst [vmem:[#allocation2 + $0x1a8] sm:$0xff] %v828
    %893 = vst [vmem:[#allocation2 + $0x1b0] sm:$0xff] %v829
    %894 = vst [vmem:[#allocation2 + $0x1b8] sm:$0xff] %v830
    %895 = vst [vmem:[#allocation2 + $0x1c0] sm:$0xff] %v831
    %896 = vst [vmem:[#allocation2 + $0x1c8] sm:$0xff] %v832
    %897 = vst [vmem:[#allocation2 + $0x1d0] sm:$0xff] %v833
    %898 = vst [vmem:[#allocation2 + $0x1d8] sm:$0xff] %v834
    %899 = vst [vmem:[#allocation2 + $0x1e0] sm:$0xff] %v835
    %900 = vst [vmem:[#allocation2 + $0x1e8] sm:$0xff] %v836
    %901 = vst [vmem:[#allocation2 + $0x1f0] sm:$0xff] %v837
    %902 = vst [vmem:[#allocation2 + $0x1f8] sm:$0xff] %v838
    // Predicated region
    $region14: #{tpu_custom_call.1} parent=1 // pred_check
      _
    $region15: #{tpu_custom_call.1} parent=1 // pred_check_branch
      %904 = sbr.rel (0) target = $region17
    $region16: #{tpu_custom_call.1} parent=1 // pred_region
      %s906 = ssub.s32 8192, 8192
      %907 = vsyncadd [#allocation3], %s906
      %s908 = sshll.u32 [#allocation2], 4
      %s909 = int_to_ptr.vmem [resolvable:$true] %s908
      %914 = dma.vmem_to_hbm [thread:$0]  %s909, 8192, %s3, [#allocation3], 128, 128, 8
    $region17: #{tpu_custom_call.1} parent=1 // pred_fallthru
      _
    // Predicated region
    $region18: #{tpu_custom_call.1} parent=1 // pred_check
      _
    $region19: #{tpu_custom_call.1} parent=1 // pred_check_branch
      %916 = sbr.rel (0) target = $region21
    $region20: #{tpu_custom_call.1} parent=1 // pred_region
      %917 = dma.done [#allocation3], 8192
    $region21: #{tpu_custom_call.1} parent=1 // pred_fallthru
      _
    %918 = vsyncpa [#allocation3], 1

</llo_original>
